<compile_context>
chip_gen: v5e
topology: v5e:2x2
jax: 0.10.0
libtpu: 0.0.40
codegen_flags: <defaults>
</compile_context>

<pallas_src>
import functools

import jax
import jax.numpy as jnp
from jax.experimental import pallas as pl
from jax.experimental.pallas import tpu as pltpu

EPS = 1e-5  # nn.LayerNorm default eps


def _mres_block_kernel(x_ref, m_ref,
                       g1_ref, b1_ref, w1_ref,
                       g2_ref, b2_ref, w2p_ref, bias2p_ref,
                       o_ref, *, K, pad_l, matmul_dtype):
    Bb, cin, Tp = x_ref.shape
    cout = o_ref.shape[1]

    # Read the (tiny) parameters once per grid step.
    w1 = w1_ref[...]          # (cout, K*cin)        matmul dtype
    w2p = w2p_ref[...]        # (cout, K*cout+cin)   matmul dtype (conv_2 | proj fused)
    g1 = g1_ref[...]          # (cin, 1)
    b1 = b1_ref[...]
    g2 = g2_ref[...]          # (cout, 1)
    b2 = b2_ref[...]
    bias2p = bias2p_ref[...]  # (cout, 1)  = conv_2 bias + proj bias

    # Column index for zeroing the wrap-around columns produced by pltpu.roll.
    col = jax.lax.broadcasted_iota(jnp.int32, (1, Tp), 1)
    valid = {}
    for k in range(K):
        d = k - pad_l
        if d != 0:
            valid[k] = ((col + d) >= 0) & ((col + d) < Tp)

    def tap_stack(a, extra=None):
        """Stack K lane-shifted copies of a:(C,Tp) along channels -> (K*C[+Cex], Tp).

        Shifts go through the XLU (pltpu.roll), which co-issues with the matmul;
        wrap columns are zeroed so the stack reproduces 'same' zero padding exactly.
        """
        taps = []
        for k in range(K):
            d = k - pad_l
            if d == 0:
                taps.append(a)
            else:
                sh = pltpu.roll(a, shift=(-d) % Tp, axis=1)      # sh[:, t] = a[:, t+d]
                taps.append(jnp.where(valid[k], sh, 0.0))
        if extra is not None:
            taps.append(extra)
        # Single downcast at the MXU boundary (keeps elementwise math in f32).
        return jnp.concatenate(taps, axis=0).astype(matmul_dtype)

    def masked_ln_swish(v, mask, inv_cnt, gamma, beta):
        """swish(mask * MaskLayerNorm1d(v)) for one batch element.

        v:(C,Tp) mask:(1,Tp) gamma,beta:(C,1).  Stats use ALL entries of v (no masking
        of the sums) but the normalizer count comes from the mask — exactly as in the
        PyTorch module.  rsqrt goes to the EUP slot; mask is fused into one expression.
        """
        mean = jnp.sum(v) * inv_cnt
        var = jnp.sum(v * v) * inv_cnt - mean * mean
        inv_std = jax.lax.rsqrt(jnp.maximum(var, EPS))           # clamp(eps) ** 0.5
        y = mask * ((v - mean) * (gamma * inv_std) + beta)
        return y * jax.nn.sigmoid(y)                              # fused swish

    for b in range(Bb):
        x = x_ref[b].astype(jnp.float32)        # (cin, Tp)  original residual
        mask = m_ref[b].astype(jnp.float32)     # (1, Tp)
        msum = jnp.sum(mask)                    # reused by both layernorms

        # --- norm_1 -> mask -> swish -> conv_1 (no bias) ---
        y = masked_ln_swish(x, mask, 1.0 / (msum * cin), g1, b1)
        h = jnp.dot(w1, tap_stack(y), preferred_element_type=jnp.float32)   # (cout, Tp)

        # --- mask -> norm_2 -> mask -> swish ---
        hm = mask * h
        z = masked_ln_swish(hm, mask, 1.0 / (msum * cout), g2, b2)

        # --- conv_2 (+bias) fused with the 1x1 projection of the ORIGINAL residual ---
        out = jnp.dot(w2p, tap_stack(z, extra=x),
                      preferred_element_type=jnp.float32) + bias2p

        o_ref[b] = (mask * out).astype(o_ref.dtype)


@functools.partial(jax.jit, static_argnames=("matmul_dtype", "block_b"))
def mresidual_block(x, mask, params, *, matmul_dtype=jnp.bfloat16, block_b=None):
    B, cin, T = x.shape
    K, cout, _ = params["w1"].shape
    pad_l = (K - 1) // 2   # PyTorch 'same': left = total // 2

    # Lane-dense time axis: zero-pad T up to a multiple of 128.
    Tp = pl.cdiv(T, 128) * 128
    if Tp != T:
        x = jnp.pad(x, ((0, 0), (0, 0), (0, Tp - T)))
        mask = jnp.pad(mask, ((0, 0), (0, Tp - T)))
    mask3 = mask[:, None, :].astype(x.dtype)    # (B, 1, Tp)

    # Flatten conv weights for one K*C-contraction matmul per conv; fuse the 1x1
    # projection into conv_2's matmul and its bias into conv_2's bias.
    w1f = jnp.transpose(params["w1"], (1, 0, 2)).reshape(cout, K * cin)
    w2f = jnp.transpose(params["w2"], (1, 0, 2)).reshape(cout, K * cout)
    w2p = jnp.concatenate([w2f, params["pw"]], axis=1)
    w1f = w1f.astype(matmul_dtype)
    w2p = w2p.astype(matmul_dtype)
    bias2p = (params["cb2"] + params["pb"]).astype(jnp.float32)

    # Batch elements per grid step: amortize per-step pipeline overhead while keeping
    # the f32 working set comfortably inside VMEM on every TPU generation (v7x: 64 MiB).
    per_b_bytes = 4 * Tp * ((K + 3) * cin + (K + 6) * cout)
    if block_b is None:
        block_b = max(1, min(B, (20 * 1024 * 1024) // max(per_b_bytes, 1)))
    block_b = max(1, min(block_b, B))
    while B % block_b:
        block_b -= 1

    def rep(shape):
        zeros = (0,) * len(shape)
        return pl.BlockSpec(shape, lambda i, _z=zeros: _z)

    kernel = functools.partial(_mres_block_kernel, K=K, pad_l=pad_l,
                               matmul_dtype=matmul_dtype)

    out = pl.pallas_call(
        kernel,
        out_shape=jax.ShapeDtypeStruct((B, cout, Tp), x.dtype),
        grid=(B // block_b,),
        in_specs=[
            pl.BlockSpec((block_b, cin, Tp), lambda i: (i, 0, 0)),   # x
            pl.BlockSpec((block_b, 1, Tp), lambda i: (i, 0, 0)),     # mask
            rep((cin, 1)), rep((cin, 1)),                            # norm_1 gamma/beta
            rep((cout, K * cin)),                                    # conv_1 weight (flat)
            rep((cout, 1)), rep((cout, 1)),                          # norm_2 gamma/beta
            rep((cout, K * cout + cin)),                             # conv_2 | proj weight
            rep((cout, 1)),                                          # conv_2 bias + proj bias
        ],
        out_specs=pl.BlockSpec((block_b, cout, Tp), lambda i: (i, 0, 0)),
        compiler_params=pltpu.CompilerParams(
            dimension_semantics=("parallel",),          # batch elements independent
            vmem_limit_bytes=48 * 1024 * 1024),
    )(x, mask3,
      params["g1"], params["b1"], w1f,
      params["g2"], params["b2"], w2p, bias2p)

    return out[:, :, :T]


# ----------------------------- pure-JAX reference -----------------------------
def _reference(x, mask, p):
    m = mask[:, None, :]  # (B,1,T)

    def masked_ln(v, gamma, beta):
        C = v.shape[1]
        cnt = m.sum(axis=(1, 2), keepdims=True) * C
        vmean = v.sum(axis=(1, 2), keepdims=True) / cnt
        vvmean = (v * v).sum(axis=(1, 2), keepdims=True) / cnt
        var = vvmean - vmean * vmean
        std = jnp.maximum(var, EPS) ** 0.5
        return (v - vmean) * (gamma[None] / std) + beta[None]

    def conv(v, w, b=None):
        wt = jnp.transpose(w, (1, 2, 0))  # (Cout, Cin, K)
        out = jax.lax.conv_general_dilated(
            v, wt, window_strides=(1,), padding="SAME",
            dimension_numbers=("NCH", "OIH", "NCH"))
        return out if b is None else out + b[None]

    y = masked_ln(x, p["g1"], p["b1"])
    y = m * y
    y = y * jax.nn.sigmoid(y)
    h = conv(y, p["w1"])
    h = m * h
    z = masked_ln(h, p["g2"], p["b2"])
    z = m * z
    z = z * jax.nn.sigmoid(z)
    o = conv(z, p["w2"], p["cb2"])
    r = jnp.einsum("oc,bct->bot", p["pw"], x) + p["pb"][None]
    return m * (o + r)


if __name__ == "__main__":
    B, Cin, Cout, T, K = 2, 4, 8, 16, 3

    key = jax.random.PRNGKey(0)
    ks = jax.random.split(key, 12)

    params = {
        "g1": 1.0 + 0.1 * jax.random.normal(ks[0], (Cin, 1), jnp.float32),
        "b1": 0.1 * jax.random.normal(ks[1], (Cin, 1), jnp.float32),
        "w1": 0.2 * jax.random.normal(ks[2], (K, Cout, Cin), jnp.float32),
        "g2": 1.0 + 0.1 * jax.random.normal(ks[3], (Cout, 1), jnp.float32),
        "b2": 0.1 * jax.random.normal(ks[4], (Cout, 1), jnp.float32),
        "w2": 0.2 * jax.random.normal(ks[5], (K, Cout, Cout), jnp.float32),
        "cb2": 0.1 * jax.random.normal(ks[6], (Cout, 1), jnp.float32),
        "pw": 0.2 * jax.random.normal(ks[7], (Cout, Cin), jnp.float32),
        "pb": 0.1 * jax.random.normal(ks[8], (Cout, 1), jnp.float32),
    }

    x = jax.random.normal(ks[9], (B, Cin, T), jnp.float32)
    lengths = jnp.array([12, 16], jnp.int32)
    mask = (jnp.arange(T)[None, :] < lengths[:, None]).astype(jnp.float32)  # (B, T)

    # Optimized path: bf16 MXU operands, f32 accumulation.
    out_bf16 = mresidual_block(x, mask, params)
    # Exact-precision path for a tight numerical check.
    out_f32 = mresidual_block(x, mask, params, matmul_dtype=jnp.float32)
    jax.block_until_ready((out_bf16, out_f32))

    ref = _reference(x, mask, params)
    assert out_bf16.shape == (B, Cout, T)
    assert out_f32.shape == (B, Cout, T)
    err32 = jnp.max(jnp.abs(out_f32 - ref))
    err16 = jnp.max(jnp.abs(out_bf16 - ref))
    assert jnp.allclose(out_f32, ref, rtol=1e-3, atol=1e-3), f"f32 max abs diff = {err32}"
    assert jnp.allclose(out_bf16, ref, rtol=5e-2, atol=5e-2), f"bf16 max abs diff = {err16}"

    print("KERNEL_OK")
</pallas_src>

<mosaic_0001>
module attributes {stable_mosaic.version = 11 : i64} {
  func.func @_mres_block_kernel(%arg0: i32, %arg1: memref<2x4x128xf32, #tpu.memory_space<vmem>>, %arg2: memref<2x1x128xf32, #tpu.memory_space<vmem>>, %arg3: memref<4x1xf32, #tpu.memory_space<vmem>>, %arg4: memref<4x1xf32, #tpu.memory_space<vmem>>, %arg5: memref<8x12xbf16, #tpu.memory_space<vmem>>, %arg6: memref<8x1xf32, #tpu.memory_space<vmem>>, %arg7: memref<8x1xf32, #tpu.memory_space<vmem>>, %arg8: memref<8x28xbf16, #tpu.memory_space<vmem>>, %arg9: memref<8x1xf32, #tpu.memory_space<vmem>>, %arg10: memref<2x8x128xf32, #tpu.memory_space<vmem>>) attributes {dimension_semantics = [#tpu.dimension_semantics<parallel>], iteration_bounds = array<i64: 1>, scalar_prefetch = 0 : i64, scratch_operands = 0 : i64, tpu.core_type = #tpu.core_type<tc>, window_params = [{transform_indices = @transform_0, window_bounds = array<i64: 2, 4, 128>}, {transform_indices = @transform_1, window_bounds = array<i64: 2, 1, 128>}, {pipeline_mode = #tpu.pipeline_mode<synchronous>, transform_indices = @transform_2, window_bounds = array<i64: 4, 1>}, {pipeline_mode = #tpu.pipeline_mode<synchronous>, transform_indices = @transform_3, window_bounds = array<i64: 4, 1>}, {pipeline_mode = #tpu.pipeline_mode<synchronous>, transform_indices = @transform_4, window_bounds = array<i64: 8, 12>}, {pipeline_mode = #tpu.pipeline_mode<synchronous>, transform_indices = @transform_5, window_bounds = array<i64: 8, 1>}, {pipeline_mode = #tpu.pipeline_mode<synchronous>, transform_indices = @transform_6, window_bounds = array<i64: 8, 1>}, {pipeline_mode = #tpu.pipeline_mode<synchronous>, transform_indices = @transform_7, window_bounds = array<i64: 8, 28>}, {pipeline_mode = #tpu.pipeline_mode<synchronous>, transform_indices = @transform_8, window_bounds = array<i64: 8, 1>}, {transform_indices = @transform_9, window_bounds = array<i64: 2, 8, 128>}]} {
    %c0 = arith.constant 0 : index
    %c0_0 = arith.constant 0 : index
    %0 = vector.load %arg5[%c0, %c0_0] : memref<8x12xbf16, #tpu.memory_space<vmem>>, vector<8x12xbf16>
    %c0_1 = arith.constant 0 : index
    %c0_2 = arith.constant 0 : index
    %1 = vector.load %arg8[%c0_1, %c0_2] : memref<8x28xbf16, #tpu.memory_space<vmem>>, vector<8x28xbf16>
    %c0_3 = arith.constant 0 : index
    %c0_4 = arith.constant 0 : index
    %2 = vector.load %arg3[%c0_3, %c0_4] : memref<4x1xf32, #tpu.memory_space<vmem>>, vector<4x1xf32>
    %c0_5 = arith.constant 0 : index
    %c0_6 = arith.constant 0 : index
    %3 = vector.load %arg4[%c0_5, %c0_6] : memref<4x1xf32, #tpu.memory_space<vmem>>, vector<4x1xf32>
    %c0_7 = arith.constant 0 : index
    %c0_8 = arith.constant 0 : index
    %4 = vector.load %arg6[%c0_7, %c0_8] : memref<8x1xf32, #tpu.memory_space<vmem>>, vector<8x1xf32>
    %c0_9 = arith.constant 0 : index
    %c0_10 = arith.constant 0 : index
    %5 = vector.load %arg7[%c0_9, %c0_10] : memref<8x1xf32, #tpu.memory_space<vmem>>, vector<8x1xf32>
    %c0_11 = arith.constant 0 : index
    %c0_12 = arith.constant 0 : index
    %6 = vector.load %arg9[%c0_11, %c0_12] : memref<8x1xf32, #tpu.memory_space<vmem>>, vector<8x1xf32>
    %7 = tpu.iota {dimensions = array<i32: 1>} : vector<1x128xi32>
    %c-1_i32 = arith.constant -1 : i32
    %8 = vector.broadcast %c-1_i32 : i32 to vector<1x128xi32>
    %9 = arith.addi %7, %8 : vector<1x128xi32>
    %c0_i32 = arith.constant 0 : i32
    %10 = vector.broadcast %c0_i32 : i32 to vector<1x128xi32>
    %11 = arith.cmpi sge, %9, %10 : vector<1x128xi32>
    %c-1_i32_13 = arith.constant -1 : i32
    %12 = vector.broadcast %c-1_i32_13 : i32 to vector<1x128xi32>
    %13 = arith.addi %7, %12 : vector<1x128xi32>
    %c128_i32 = arith.constant 128 : i32
    %14 = vector.broadcast %c128_i32 : i32 to vector<1x128xi32>
    %15 = arith.cmpi slt, %13, %14 : vector<1x128xi32>
    %16 = arith.andi %11, %15 : vector<1x128xi1>
    %c1_i32 = arith.constant 1 : i32
    %17 = vector.broadcast %c1_i32 : i32 to vector<1x128xi32>
    %18 = arith.addi %7, %17 : vector<1x128xi32>
    %c0_i32_14 = arith.constant 0 : i32
    %19 = vector.broadcast %c0_i32_14 : i32 to vector<1x128xi32>
    %20 = arith.cmpi sge, %18, %19 : vector<1x128xi32>
    %c1_i32_15 = arith.constant 1 : i32
    %21 = vector.broadcast %c1_i32_15 : i32 to vector<1x128xi32>
    %22 = arith.addi %7, %21 : vector<1x128xi32>
    %c128_i32_16 = arith.constant 128 : i32
    %23 = vector.broadcast %c128_i32_16 : i32 to vector<1x128xi32>
    %24 = arith.cmpi slt, %22, %23 : vector<1x128xi32>
    %25 = arith.andi %20, %24 : vector<1x128xi1>
    %c0_17 = arith.constant 0 : index
    %c0_18 = arith.constant 0 : index
    %c0_19 = arith.constant 0 : index
    %26 = vector.load %arg1[%c0_17, %c0_18, %c0_19] : memref<2x4x128xf32, #tpu.memory_space<vmem>>, vector<1x4x128xf32>
    %27 = vector.shape_cast %26 : vector<1x4x128xf32> to vector<4x128xf32>
    %c0_20 = arith.constant 0 : index
    %c0_21 = arith.constant 0 : index
    %c0_22 = arith.constant 0 : index
    %28 = vector.load %arg2[%c0_20, %c0_21, %c0_22] : memref<2x1x128xf32, #tpu.memory_space<vmem>>, vector<1x1x128xf32>
    %29 = vector.shape_cast %28 : vector<1x1x128xf32> to vector<1x128xf32>
    %30 = vector.shape_cast %29 : vector<1x128xf32> to vector<1x1x128xf32>
    %cst = arith.constant dense<0.000000e+00> : vector<1xf32>
    %31 = vector.multi_reduction <add>, %30, %cst [1, 2] : vector<1x1x128xf32> to vector<1xf32>
    %32 = vector.shape_cast %31 : vector<1xf32> to vector<1x1x1xf32>
    %33 = vector.extract %32[0, 0, 0] : f32 from vector<1x1x1xf32>
    %cst_23 = arith.constant 4.000000e+00 : f32
    %34 = arith.mulf %33, %cst_23 : f32
    %cst_24 = arith.constant 1.000000e+00 : f32
    %35 = arith.divf %cst_24, %34 : f32
    %36 = vector.shape_cast %27 : vector<4x128xf32> to vector<1x4x128xf32>
    %cst_25 = arith.constant dense<0.000000e+00> : vector<1xf32>
    %37 = vector.multi_reduction <add>, %36, %cst_25 [1, 2] : vector<1x4x128xf32> to vector<1xf32>
    %38 = vector.shape_cast %37 : vector<1xf32> to vector<1x1x1xf32>
    %39 = vector.extract %38[0, 0, 0] : f32 from vector<1x1x1xf32>
    %40 = arith.mulf %39, %35 : f32
    %41 = arith.mulf %27, %27 : vector<4x128xf32>
    %42 = vector.shape_cast %41 : vector<4x128xf32> to vector<1x4x128xf32>
    %cst_26 = arith.constant dense<0.000000e+00> : vector<1xf32>
    %43 = vector.multi_reduction <add>, %42, %cst_26 [1, 2] : vector<1x4x128xf32> to vector<1xf32>
    %44 = vector.shape_cast %43 : vector<1xf32> to vector<1x1x1xf32>
    %45 = vector.extract %44[0, 0, 0] : f32 from vector<1x1x1xf32>
    %46 = arith.mulf %45, %35 : f32
    %47 = arith.mulf %40, %40 : f32
    %48 = arith.subf %46, %47 : f32
    %cst_27 = arith.constant 9.99999974E-6 : f32
    %49 = arith.maximumf %48, %cst_27 : f32
    %50 = math.rsqrt %49 : f32
    %51 = vector.broadcast %40 : f32 to vector<4x128xf32>
    %52 = arith.subf %27, %51 : vector<4x128xf32>
    %53 = vector.broadcast %50 : f32 to vector<4x1xf32>
    %54 = arith.mulf %2, %53 : vector<4x1xf32>
    %55 = vector.broadcast %54 : vector<4x1xf32> to vector<4x128xf32>
    %56 = arith.mulf %52, %55 : vector<4x128xf32>
    %57 = vector.broadcast %3 : vector<4x1xf32> to vector<4x128xf32>
    %58 = arith.addf %56, %57 : vector<4x128xf32>
    %59 = vector.broadcast %29 : vector<1x128xf32> to vector<4x128xf32>
    %60 = arith.mulf %59, %58 : vector<4x128xf32>
    %61 = arith.negf %60 : vector<4x128xf32>
    %62 = math.exp %61 : vector<4x128xf32>
    %cst_28 = arith.constant 1.000000e+00 : f32
    %63 = vector.broadcast %cst_28 : f32 to vector<4x128xf32>
    %64 = arith.addf %63, %62 : vector<4x128xf32>
    %65 = arith.divf %63, %64 : vector<4x128xf32>
    %66 = arith.mulf %60, %65 : vector<4x128xf32>
    %c1_i32_29 = arith.constant 1 : i32
    %67 = tpu.dynamic_rotate %66 by %c1_i32_29 dim 1 : vector<4x128xf32>, i32 -> vector<4x128xf32>
    %cst_30 = arith.constant 0.000000e+00 : f32
    %68 = vector.shape_cast %16 : vector<1x128xi1> to vector<1x128xi1>
    %69 = vector.broadcast %68 : vector<1x128xi1> to vector<4x128xi1>
    %70 = vector.broadcast %cst_30 : f32 to vector<4x128xf32>
    %71 = arith.select %69, %67, %70 : vector<4x128xi1>, vector<4x128xf32>
    %c127_i32 = arith.constant 127 : i32
    %72 = tpu.dynamic_rotate %66 by %c127_i32 dim 1 : vector<4x128xf32>, i32 -> vector<4x128xf32>
    %cst_31 = arith.constant 0.000000e+00 : f32
    %73 = vector.shape_cast %25 : vector<1x128xi1> to vector<1x128xi1>
    %74 = vector.broadcast %73 : vector<1x128xi1> to vector<4x128xi1>
    %75 = vector.broadcast %cst_31 : f32 to vector<4x128xf32>
    %76 = arith.select %74, %72, %75 : vector<4x128xi1>, vector<4x128xf32>
    %77 = tpu.concatenate %71, %66, %76 in 0 : vector<4x128xf32>, vector<4x128xf32>, vector<4x128xf32> -> vector<12x128xf32>
    %78 = arith.truncf %77 : vector<12x128xf32> to vector<12x128xbf16>
    %cst_32 = arith.constant dense<0.000000e+00> : vector<8x128xf32>
    %79 = tpu.matmul %0, %78, %cst_32 {dimension_numbers = #tpu.dot_dimension_numbers<[1], [0], [0], [1], [0, 0, 1, 1], [], []>} : vector<8x12xbf16>, vector<12x128xbf16>, vector<8x128xf32> -> vector<8x128xf32>
    %80 = vector.broadcast %29 : vector<1x128xf32> to vector<8x128xf32>
    %81 = arith.mulf %80, %79 : vector<8x128xf32>
    %cst_33 = arith.constant 8.000000e+00 : f32
    %82 = arith.mulf %33, %cst_33 : f32
    %cst_34 = arith.constant 1.000000e+00 : f32
    %83 = arith.divf %cst_34, %82 : f32
    %84 = vector.shape_cast %81 : vector<8x128xf32> to vector<1x8x128xf32>
    %cst_35 = arith.constant dense<0.000000e+00> : vector<1xf32>
    %85 = vector.multi_reduction <add>, %84, %cst_35 [1, 2] : vector<1x8x128xf32> to vector<1xf32>
    %86 = vector.shape_cast %85 : vector<1xf32> to vector<1x1x1xf32>
    %87 = vector.extract %86[0, 0, 0] : f32 from vector<1x1x1xf32>
    %88 = arith.mulf %87, %83 : f32
    %89 = arith.mulf %81, %81 : vector<8x128xf32>
    %90 = vector.shape_cast %89 : vector<8x128xf32> to vector<1x8x128xf32>
    %cst_36 = arith.constant dense<0.000000e+00> : vector<1xf32>
    %91 = vector.multi_reduction <add>, %90, %cst_36 [1, 2] : vector<1x8x128xf32> to vector<1xf32>
    %92 = vector.shape_cast %91 : vector<1xf32> to vector<1x1x1xf32>
    %93 = vector.extract %92[0, 0, 0] : f32 from vector<1x1x1xf32>
    %94 = arith.mulf %93, %83 : f32
    %95 = arith.mulf %88, %88 : f32
    %96 = arith.subf %94, %95 : f32
    %cst_37 = arith.constant 9.99999974E-6 : f32
    %97 = arith.maximumf %96, %cst_37 : f32
    %98 = math.rsqrt %97 : f32
    %99 = vector.broadcast %88 : f32 to vector<8x128xf32>
    %100 = arith.subf %81, %99 : vector<8x128xf32>
    %101 = vector.broadcast %98 : f32 to vector<8x1xf32>
    %102 = arith.mulf %4, %101 : vector<8x1xf32>
    %103 = vector.broadcast %102 : vector<8x1xf32> to vector<8x128xf32>
    %104 = arith.mulf %100, %103 : vector<8x128xf32>
    %105 = vector.broadcast %5 : vector<8x1xf32> to vector<8x128xf32>
    %106 = arith.addf %104, %105 : vector<8x128xf32>
    %107 = vector.broadcast %29 : vector<1x128xf32> to vector<8x128xf32>
    %108 = arith.mulf %107, %106 : vector<8x128xf32>
    %109 = arith.negf %108 : vector<8x128xf32>
    %110 = math.exp %109 : vector<8x128xf32>
    %cst_38 = arith.constant 1.000000e+00 : f32
    %111 = vector.broadcast %cst_38 : f32 to vector<8x128xf32>
    %112 = arith.addf %111, %110 : vector<8x128xf32>
    %113 = arith.divf %111, %112 : vector<8x128xf32>
    %114 = arith.mulf %108, %113 : vector<8x128xf32>
    %c1_i32_39 = arith.constant 1 : i32
    %115 = tpu.dynamic_rotate %114 by %c1_i32_39 dim 1 : vector<8x128xf32>, i32 -> vector<8x128xf32>
    %cst_40 = arith.constant 0.000000e+00 : f32
    %116 = vector.shape_cast %16 : vector<1x128xi1> to vector<1x128xi1>
    %117 = vector.broadcast %116 : vector<1x128xi1> to vector<8x128xi1>
    %118 = vector.broadcast %cst_40 : f32 to vector<8x128xf32>
    %119 = arith.select %117, %115, %118 : vector<8x128xi1>, vector<8x128xf32>
    %c127_i32_41 = arith.constant 127 : i32
    %120 = tpu.dynamic_rotate %114 by %c127_i32_41 dim 1 : vector<8x128xf32>, i32 -> vector<8x128xf32>
    %cst_42 = arith.constant 0.000000e+00 : f32
    %121 = vector.shape_cast %25 : vector<1x128xi1> to vector<1x128xi1>
    %122 = vector.broadcast %121 : vector<1x128xi1> to vector<8x128xi1>
    %123 = vector.broadcast %cst_42 : f32 to vector<8x128xf32>
    %124 = arith.select %122, %120, %123 : vector<8x128xi1>, vector<8x128xf32>
    %125 = tpu.concatenate %119, %114, %124, %27 in 0 : vector<8x128xf32>, vector<8x128xf32>, vector<8x128xf32>, vector<4x128xf32> -> vector<28x128xf32>
    %126 = arith.truncf %125 : vector<28x128xf32> to vector<28x128xbf16>
    %cst_43 = arith.constant dense<0.000000e+00> : vector<8x128xf32>
    %127 = tpu.matmul %1, %126, %cst_43 {dimension_numbers = #tpu.dot_dimension_numbers<[1], [0], [0], [1], [0, 0, 1, 1], [], []>} : vector<8x28xbf16>, vector<28x128xbf16>, vector<8x128xf32> -> vector<8x128xf32>
    %128 = vector.broadcast %6 : vector<8x1xf32> to vector<8x128xf32>
    %129 = arith.addf %127, %128 : vector<8x128xf32>
    %130 = vector.broadcast %29 : vector<1x128xf32> to vector<8x128xf32>
    %131 = arith.mulf %130, %129 : vector<8x128xf32>
    %c0_44 = arith.constant 0 : index
    %c0_45 = arith.constant 0 : index
    %c0_46 = arith.constant 0 : index
    %132 = vector.load %arg10[%c0_44, %c0_45, %c0_46] : memref<2x8x128xf32, #tpu.memory_space<vmem>>, vector<1x8x128xf32>
    %133 = vector.shape_cast %132 : vector<1x8x128xf32> to vector<8x128xf32>
    %134 = vector.shape_cast %131 : vector<8x128xf32> to vector<1x8x128xf32>
    tpu.vector_store %arg10[%c0_44, %c0_45, %c0_46], %134 {strides = array<i32>} : memref<2x8x128xf32, #tpu.memory_space<vmem>>, vector<1x8x128xf32>,
    %c1 = arith.constant 1 : index
    %c0_47 = arith.constant 0 : index
    %c0_48 = arith.constant 0 : index
    %135 = vector.load %arg1[%c1, %c0_47, %c0_48] : memref<2x4x128xf32, #tpu.memory_space<vmem>>, vector<1x4x128xf32>
    %136 = vector.shape_cast %135 : vector<1x4x128xf32> to vector<4x128xf32>
    %c1_49 = arith.constant 1 : index
    %c0_50 = arith.constant 0 : index
    %c0_51 = arith.constant 0 : index
    %137 = vector.load %arg2[%c1_49, %c0_50, %c0_51] : memref<2x1x128xf32, #tpu.memory_space<vmem>>, vector<1x1x128xf32>
    %138 = vector.shape_cast %137 : vector<1x1x128xf32> to vector<1x128xf32>
    %139 = vector.shape_cast %138 : vector<1x128xf32> to vector<1x1x128xf32>
    %cst_52 = arith.constant dense<0.000000e+00> : vector<1xf32>
    %140 = vector.multi_reduction <add>, %139, %cst_52 [1, 2] : vector<1x1x128xf32> to vector<1xf32>
    %141 = vector.shape_cast %140 : vector<1xf32> to vector<1x1x1xf32>
    %142 = vector.extract %141[0, 0, 0] : f32 from vector<1x1x1xf32>
    %cst_53 = arith.constant 4.000000e+00 : f32
    %143 = arith.mulf %142, %cst_53 : f32
    %cst_54 = arith.constant 1.000000e+00 : f32
    %144 = arith.divf %cst_54, %143 : f32
    %145 = vector.shape_cast %136 : vector<4x128xf32> to vector<1x4x128xf32>
    %cst_55 = arith.constant dense<0.000000e+00> : vector<1xf32>
    %146 = vector.multi_reduction <add>, %145, %cst_55 [1, 2] : vector<1x4x128xf32> to vector<1xf32>
    %147 = vector.shape_cast %146 : vector<1xf32> to vector<1x1x1xf32>
    %148 = vector.extract %147[0, 0, 0] : f32 from vector<1x1x1xf32>
    %149 = arith.mulf %148, %144 : f32
    %150 = arith.mulf %136, %136 : vector<4x128xf32>
    %151 = vector.shape_cast %150 : vector<4x128xf32> to vector<1x4x128xf32>
    %cst_56 = arith.constant dense<0.000000e+00> : vector<1xf32>
    %152 = vector.multi_reduction <add>, %151, %cst_56 [1, 2] : vector<1x4x128xf32> to vector<1xf32>
    %153 = vector.shape_cast %152 : vector<1xf32> to vector<1x1x1xf32>
    %154 = vector.extract %153[0, 0, 0] : f32 from vector<1x1x1xf32>
    %155 = arith.mulf %154, %144 : f32
    %156 = arith.mulf %149, %149 : f32
    %157 = arith.subf %155, %156 : f32
    %cst_57 = arith.constant 9.99999974E-6 : f32
    %158 = arith.maximumf %157, %cst_57 : f32
    %159 = math.rsqrt %158 : f32
    %160 = vector.broadcast %149 : f32 to vector<4x128xf32>
    %161 = arith.subf %136, %160 : vector<4x128xf32>
    %162 = vector.broadcast %159 : f32 to vector<4x1xf32>
    %163 = arith.mulf %2, %162 : vector<4x1xf32>
    %164 = vector.broadcast %163 : vector<4x1xf32> to vector<4x128xf32>
    %165 = arith.mulf %161, %164 : vector<4x128xf32>
    %166 = vector.broadcast %3 : vector<4x1xf32> to vector<4x128xf32>
    %167 = arith.addf %165, %166 : vector<4x128xf32>
    %168 = vector.broadcast %138 : vector<1x128xf32> to vector<4x128xf32>
    %169 = arith.mulf %168, %167 : vector<4x128xf32>
    %170 = arith.negf %169 : vector<4x128xf32>
    %171 = math.exp %170 : vector<4x128xf32>
    %cst_58 = arith.constant 1.000000e+00 : f32
    %172 = vector.broadcast %cst_58 : f32 to vector<4x128xf32>
    %173 = arith.addf %172, %171 : vector<4x128xf32>
    %174 = arith.divf %172, %173 : vector<4x128xf32>
    %175 = arith.mulf %169, %174 : vector<4x128xf32>
    %c1_i32_59 = arith.constant 1 : i32
    %176 = tpu.dynamic_rotate %175 by %c1_i32_59 dim 1 : vector<4x128xf32>, i32 -> vector<4x128xf32>
    %cst_60 = arith.constant 0.000000e+00 : f32
    %177 = vector.shape_cast %16 : vector<1x128xi1> to vector<1x128xi1>
    %178 = vector.broadcast %177 : vector<1x128xi1> to vector<4x128xi1>
    %179 = vector.broadcast %cst_60 : f32 to vector<4x128xf32>
    %180 = arith.select %178, %176, %179 : vector<4x128xi1>, vector<4x128xf32>
    %c127_i32_61 = arith.constant 127 : i32
    %181 = tpu.dynamic_rotate %175 by %c127_i32_61 dim 1 : vector<4x128xf32>, i32 -> vector<4x128xf32>
    %cst_62 = arith.constant 0.000000e+00 : f32
    %182 = vector.shape_cast %25 : vector<1x128xi1> to vector<1x128xi1>
    %183 = vector.broadcast %182 : vector<1x128xi1> to vector<4x128xi1>
    %184 = vector.broadcast %cst_62 : f32 to vector<4x128xf32>
    %185 = arith.select %183, %181, %184 : vector<4x128xi1>, vector<4x128xf32>
    %186 = tpu.concatenate %180, %175, %185 in 0 : vector<4x128xf32>, vector<4x128xf32>, vector<4x128xf32> -> vector<12x128xf32>
    %187 = arith.truncf %186 : vector<12x128xf32> to vector<12x128xbf16>
    %cst_63 = arith.constant dense<0.000000e+00> : vector<8x128xf32>
    %188 = tpu.matmul %0, %187, %cst_63 {dimension_numbers = #tpu.dot_dimension_numbers<[1], [0], [0], [1], [0, 0, 1, 1], [], []>} : vector<8x12xbf16>, vector<12x128xbf16>, vector<8x128xf32> -> vector<8x128xf32>
    %189 = vector.broadcast %138 : vector<1x128xf32> to vector<8x128xf32>
    %190 = arith.mulf %189, %188 : vector<8x128xf32>
    %cst_64 = arith.constant 8.000000e+00 : f32
    %191 = arith.mulf %142, %cst_64 : f32
    %cst_65 = arith.constant 1.000000e+00 : f32
    %192 = arith.divf %cst_65, %191 : f32
    %193 = vector.shape_cast %190 : vector<8x128xf32> to vector<1x8x128xf32>
    %cst_66 = arith.constant dense<0.000000e+00> : vector<1xf32>
    %194 = vector.multi_reduction <add>, %193, %cst_66 [1, 2] : vector<1x8x128xf32> to vector<1xf32>
    %195 = vector.shape_cast %194 : vector<1xf32> to vector<1x1x1xf32>
    %196 = vector.extract %195[0, 0, 0] : f32 from vector<1x1x1xf32>
    %197 = arith.mulf %196, %192 : f32
    %198 = arith.mulf %190, %190 : vector<8x128xf32>
    %199 = vector.shape_cast %198 : vector<8x128xf32> to vector<1x8x128xf32>
    %cst_67 = arith.constant dense<0.000000e+00> : vector<1xf32>
    %200 = vector.multi_reduction <add>, %199, %cst_67 [1, 2] : vector<1x8x128xf32> to vector<1xf32>
    %201 = vector.shape_cast %200 : vector<1xf32> to vector<1x1x1xf32>
    %202 = vector.extract %201[0, 0, 0] : f32 from vector<1x1x1xf32>
    %203 = arith.mulf %202, %192 : f32
    %204 = arith.mulf %197, %197 : f32
    %205 = arith.subf %203, %204 : f32
    %cst_68 = arith.constant 9.99999974E-6 : f32
    %206 = arith.maximumf %205, %cst_68 : f32
    %207 = math.rsqrt %206 : f32
    %208 = vector.broadcast %197 : f32 to vector<8x128xf32>
    %209 = arith.subf %190, %208 : vector<8x128xf32>
    %210 = vector.broadcast %207 : f32 to vector<8x1xf32>
    %211 = arith.mulf %4, %210 : vector<8x1xf32>
    %212 = vector.broadcast %211 : vector<8x1xf32> to vector<8x128xf32>
    %213 = arith.mulf %209, %212 : vector<8x128xf32>
    %214 = vector.broadcast %5 : vector<8x1xf32> to vector<8x128xf32>
    %215 = arith.addf %213, %214 : vector<8x128xf32>
    %216 = vector.broadcast %138 : vector<1x128xf32> to vector<8x128xf32>
    %217 = arith.mulf %216, %215 : vector<8x128xf32>
    %218 = arith.negf %217 : vector<8x128xf32>
    %219 = math.exp %218 : vector<8x128xf32>
    %cst_69 = arith.constant 1.000000e+00 : f32
    %220 = vector.broadcast %cst_69 : f32 to vector<8x128xf32>
    %221 = arith.addf %220, %219 : vector<8x128xf32>
    %222 = arith.divf %220, %221 : vector<8x128xf32>
    %223 = arith.mulf %217, %222 : vector<8x128xf32>
    %c1_i32_70 = arith.constant 1 : i32
    %224 = tpu.dynamic_rotate %223 by %c1_i32_70 dim 1 : vector<8x128xf32>, i32 -> vector<8x128xf32>
    %cst_71 = arith.constant 0.000000e+00 : f32
    %225 = vector.shape_cast %16 : vector<1x128xi1> to vector<1x128xi1>
    %226 = vector.broadcast %225 : vector<1x128xi1> to vector<8x128xi1>
    %227 = vector.broadcast %cst_71 : f32 to vector<8x128xf32>
    %228 = arith.select %226, %224, %227 : vector<8x128xi1>, vector<8x128xf32>
    %c127_i32_72 = arith.constant 127 : i32
    %229 = tpu.dynamic_rotate %223 by %c127_i32_72 dim 1 : vector<8x128xf32>, i32 -> vector<8x128xf32>
    %cst_73 = arith.constant 0.000000e+00 : f32
    %230 = vector.shape_cast %25 : vector<1x128xi1> to vector<1x128xi1>
    %231 = vector.broadcast %230 : vector<1x128xi1> to vector<8x128xi1>
    %232 = vector.broadcast %cst_73 : f32 to vector<8x128xf32>
    %233 = arith.select %231, %229, %232 : vector<8x128xi1>, vector<8x128xf32>
    %234 = tpu.concatenate %228, %223, %233, %136 in 0 : vector<8x128xf32>, vector<8x128xf32>, vector<8x128xf32>, vector<4x128xf32> -> vector<28x128xf32>
    %235 = arith.truncf %234 : vector<28x128xf32> to vector<28x128xbf16>
    %cst_74 = arith.constant dense<0.000000e+00> : vector<8x128xf32>
    %236 = tpu.matmul %1, %235, %cst_74 {dimension_numbers = #tpu.dot_dimension_numbers<[1], [0], [0], [1], [0, 0, 1, 1], [], []>} : vector<8x28xbf16>, vector<28x128xbf16>, vector<8x128xf32> -> vector<8x128xf32>
    %237 = vector.broadcast %6 : vector<8x1xf32> to vector<8x128xf32>
    %238 = arith.addf %236, %237 : vector<8x128xf32>
    %239 = vector.broadcast %138 : vector<1x128xf32> to vector<8x128xf32>
    %240 = arith.mulf %239, %238 : vector<8x128xf32>
    %c1_75 = arith.constant 1 : index
    %c0_76 = arith.constant 0 : index
    %c0_77 = arith.constant 0 : index
    %241 = vector.load %arg10[%c1_75, %c0_76, %c0_77] : memref<2x8x128xf32, #tpu.memory_space<vmem>>, vector<1x8x128xf32>
    %242 = vector.shape_cast %241 : vector<1x8x128xf32> to vector<8x128xf32>
    %243 = vector.shape_cast %240 : vector<8x128xf32> to vector<1x8x128xf32>
    tpu.vector_store %arg10[%c1_75, %c0_76, %c0_77], %243 {strides = array<i32>} : memref<2x8x128xf32, #tpu.memory_space<vmem>>, vector<1x8x128xf32>,
    return
  }
  func.func @transform_0(%arg0: i32) -> (i32, i32, i32) {
    %c0_i32 = arith.constant 0 : i32
    %c0_i32_0 = arith.constant 0 : i32
    %c0_i32_1 = arith.constant 0 : i32
    return %arg0, %c0_i32, %c0_i32_0 : i32, i32, i32
  }
  func.func @transform_1(%arg0: i32) -> (i32, i32, i32) {
    %c0_i32 = arith.constant 0 : i32
    %c0_i32_0 = arith.constant 0 : i32
    %c0_i32_1 = arith.constant 0 : i32
    return %arg0, %c0_i32, %c0_i32_0 : i32, i32, i32
  }
  func.func @transform_2(%arg0: i32) -> (i32, i32) {
    %c0_i32 = arith.constant 0 : i32
    %c0_i32_0 = arith.constant 0 : i32
    %c0_i32_1 = arith.constant 0 : i32
    return %c0_i32, %c0_i32_0 : i32, i32
  }
  func.func @transform_3(%arg0: i32) -> (i32, i32) {
    %c0_i32 = arith.constant 0 : i32
    %c0_i32_0 = arith.constant 0 : i32
    %c0_i32_1 = arith.constant 0 : i32
    return %c0_i32, %c0_i32_0 : i32, i32
  }
  func.func @transform_4(%arg0: i32) -> (i32, i32) {
    %c0_i32 = arith.constant 0 : i32
    %c0_i32_0 = arith.constant 0 : i32
    %c0_i32_1 = arith.constant 0 : i32
    return %c0_i32, %c0_i32_0 : i32, i32
  }
  func.func @transform_5(%arg0: i32) -> (i32, i32) {
    %c0_i32 = arith.constant 0 : i32
    %c0_i32_0 = arith.constant 0 : i32
    %c0_i32_1 = arith.constant 0 : i32
    return %c0_i32, %c0_i32_0 : i32, i32
  }
  func.func @transform_6(%arg0: i32) -> (i32, i32) {
    %c0_i32 = arith.constant 0 : i32
    %c0_i32_0 = arith.constant 0 : i32
    %c0_i32_1 = arith.constant 0 : i32
    return %c0_i32, %c0_i32_0 : i32, i32
  }
  func.func @transform_7(%arg0: i32) -> (i32, i32) {
    %c0_i32 = arith.constant 0 : i32
    %c0_i32_0 = arith.constant 0 : i32
    %c0_i32_1 = arith.constant 0 : i32
    return %c0_i32, %c0_i32_0 : i32, i32
  }
  func.func @transform_8(%arg0: i32) -> (i32, i32) {
    %c0_i32 = arith.constant 0 : i32
    %c0_i32_0 = arith.constant 0 : i32
    %c0_i32_1 = arith.constant 0 : i32
    return %c0_i32, %c0_i32_0 : i32, i32
  }
  func.func @transform_9(%arg0: i32) -> (i32, i32, i32) {
    %c0_i32 = arith.constant 0 : i32
    %c0_i32_0 = arith.constant 0 : i32
    %c0_i32_1 = arith.constant 0 : i32
    return %arg0, %c0_i32, %c0_i32_0 : i32, i32, i32
  }
}

</mosaic_0001>

<llo_original>
// kernel: mresidual_block.1
$region0: #{mresidual_block.1}
  #allocation0 [shape = 'u32[]', space=smem, size = 0x4, offset = 0x4, fixed_abs, tag = 'smem constant byte address 0x4 - core index']
  #allocation1 [shape = 'u32[72,128]{1,0:T(1,128)}', space=vmem, size = 0x9000, scoped, tag = 'internal scratch']
  %s0 = inlined_call_operand.vmem [shape: f32[2,4,128], index: 0, kind: input, shape index: {}]
  %s1 = inlined_call_operand.vmem [shape: f32[2,1,128], index: 1, kind: input, shape index: {}]
  %s2 = inlined_call_operand.vmem [shape: f32[4,1], index: 2, kind: input, shape index: {}]
  %s3 = inlined_call_operand.vmem [shape: f32[4,1], index: 3, kind: input, shape index: {}]
  %s4 = inlined_call_operand.vmem [shape: bf16[8,12], index: 4, kind: input, shape index: {}]
  %s5 = inlined_call_operand.vmem [shape: f32[8,1], index: 5, kind: input, shape index: {}]
  %s6 = inlined_call_operand.vmem [shape: f32[8,1], index: 6, kind: input, shape index: {}]
  %s7 = inlined_call_operand.vmem [shape: bf16[8,28], index: 7, kind: input, shape index: {}]
  %s8 = inlined_call_operand.vmem [shape: f32[8,1], index: 8, kind: input, shape index: {}]
  %s9 = inlined_call_operand.hbm [shape: f32[2,8,128], index: 9, kind: output, shape index: {}]
  %s10 = sld [smem:[#allocation0]]
  $region46: #{mresidual_block.1} parent=0
    _
  %s12 = ssub.s32 1, %s10
  %s13 = scalar_select 0, %s12, %s10
  $region1: #{mresidual_block.1} parent=0
    #allocation2 [shape = 'u8[8192]{0}', space=vmem, size = 0x2000, scoped, tag = 'output window, operand 0, single buffered']
    #allocation3 [shape = 's32[1]{0}', space=sflag, size = 0x4, scoped, tag = 'scoped memory for mresidual_block.1']
    %14 = vsyncpa [#allocation3], 0
    // Predicated region
    $region2: #{mresidual_block.1} parent=1 // pred_check
      _
    $region3: #{mresidual_block.1} parent=1 // pred_check_branch
      %16 = sbr.rel (0) target = $region5
    $region4: #{mresidual_block.1} parent=1 // pred_region
      _
    $region5: #{mresidual_block.1} parent=1 // pred_fallthru
      _
    // Predicated region
    $region6: #{mresidual_block.1} parent=1 // pred_check
      _
    $region7: #{mresidual_block.1} parent=1 // pred_check_branch
      %18 = sbr.rel (0) target = $region9
    $region8: #{mresidual_block.1} parent=1 // pred_region
      _
    $region9: #{mresidual_block.1} parent=1 // pred_fallthru
      _
    // Predicated region
    $region10: #{mresidual_block.1} parent=1 // pred_check
      _
    $region11: #{mresidual_block.1} parent=1 // pred_check_branch
      %20 = sbr.rel (0) target = $region13
    $region12: #{mresidual_block.1} parent=1 // pred_region
      _
    $region13: #{mresidual_block.1} parent=1 // pred_fallthru
      _
    // Predicated region
    $region14: #{mresidual_block.1} parent=1 // pred_check
      _
    $region15: #{mresidual_block.1} parent=1 // pred_check_branch
      %22 = sbr.rel (0) target = $region17
    $region16: #{mresidual_block.1} parent=1 // pred_region
      _
    $region17: #{mresidual_block.1} parent=1 // pred_fallthru
      _
    // Predicated region
    $region18: #{mresidual_block.1} parent=1 // pred_check
      _
    $region19: #{mresidual_block.1} parent=1 // pred_check_branch
      %24 = sbr.rel (0) target = $region21
    $region20: #{mresidual_block.1} parent=1 // pred_region
      _
    $region21: #{mresidual_block.1} parent=1 // pred_fallthru
      _
    // Predicated region
    $region22: #{mresidual_block.1} parent=1 // pred_check
      _
    $region23: #{mresidual_block.1} parent=1 // pred_check_branch
      %26 = sbr.rel (0) target = $region25
    $region24: #{mresidual_block.1} parent=1 // pred_region
      _
    $region25: #{mresidual_block.1} parent=1 // pred_fallthru
      _
    // Predicated region
    $region26: #{mresidual_block.1} parent=1 // pred_check
      _
    $region27: #{mresidual_block.1} parent=1 // pred_check_branch
      %28 = sbr.rel (0) target = $region29
    $region28: #{mresidual_block.1} parent=1 // pred_region
      _
    $region29: #{mresidual_block.1} parent=1 // pred_fallthru
      _
    // Predicated region
    $region30: #{mresidual_block.1} parent=1 // pred_check
      _
    $region31: #{mresidual_block.1} parent=1 // pred_check_branch
      %30 = sbr.rel (0) target = $region33
    $region32: #{mresidual_block.1} parent=1 // pred_region
      _
    $region33: #{mresidual_block.1} parent=1 // pred_fallthru
      _
    // Predicated region
    $region34: #{mresidual_block.1} parent=1 // pred_check
      _
    $region35: #{mresidual_block.1} parent=1 // pred_check_branch
      %32 = sbr.rel (0) target = $region37
    $region36: #{mresidual_block.1} parent=1 // pred_region
      _
    $region37: #{mresidual_block.1} parent=1 // pred_fallthru
      _
    %v34 = vld [vmem:[%s4] sm:$0xf]
    %v35 = vld [vmem:[%s7] sm:$0xf]
    %v36 = vld [vmem:[%s2] sm:$0xf]
    %v37 = vld [vmem:[%s3] sm:$0xf]
    %v38 = vld [vmem:[%s5] sm:$0xff]
    %v39 = vld [vmem:[%s6] sm:$0xff]
    %v40 = vld [vmem:[%s8] sm:$0xff]
    %v41 = vlaneseq
    %v42 = vand.u32 %v41, 127
    %v43 = vadd.s32 %v42, 4294967295
    %vm44 = vcmp.ge.s32.totalorder %v43, 0
    %vm45 = vcmp.lt.s32.totalorder %v43, 128
    %vm46 = vmand %vm44, %vm45
    %v47 = vadd.s32 %v42, 1
    %vm48 = vcmp.ge.s32.totalorder %v47, 0
    %vm49 = vcmp.lt.s32.totalorder %v47, 128
    %vm50 = vmand %vm48, %vm49
    %v51 = vld [vmem:[%s0] sm:$0xf]
    %v52 = vld [vmem:[%s1] sm:$0x1]
    %vm53 = vcmask 1040384
    %v54 = vsel %vm53, %v52, 0.0
    %55 = vadd.xlane.f32.xlu0 %v54
    %v56 = vpop.xlane.xlu0 %55
    %v57 = vrot.slane %v56, 4
    %v58 = vadd.f32 %v56, %v57
    %v59 = vrot.slane %v58, 2
    %v60 = vadd.f32 %v58, %v59
    %v61 = vrot.slane %v60, 1
    %v62 = vadd.f32 %v60, %v61
    %s63 = vtos %v62
    %s64 = smul.f32 %s63, 4.0
    %v65 = vstv %s64
    %v66 = vrcp.pop %v65
    %v67 = vmul.f32 %v65, %v66
    %v68 = vsub.f32 1.0, %v67
    %v69 = vmul.f32 %v66, %v68
    %v70 = vadd.f32 %v66, %v69
    %vm71 = vweird.f32 %v65
    %vm72 = vweird.f32 %v66
    %vm73 = vmor %vm71, %vm72
    %v74 = vsel %vm73, %v66, %v70
    %v75 = vand.u32 2147483647, %v65
    %vm76 = vcmp.eq.f32.partialorder %v75, 8.507059e+37
    %v77 = vand.u32 %v65, 2147483648
    %v78 = vor.u32 1.1754944e-38, %v77
    %v79 = vsel %vm76, %v78, %v74
    %s80 = vtos %v79
    %vm81 = vcmask 1043456
    %v82 = vsel %vm81, %v51, 0.0
    %83 = vadd.xlane.f32.xlu0 %v82
    %v84 = vpop.xlane.xlu0 %83
    %v85 = vrot.slane %v84, 4
    %v86 = vadd.f32 %v84, %v85
    %v87 = vrot.slane %v86, 2
    %v88 = vadd.f32 %v86, %v87
    %v89 = vrot.slane %v88, 1
    %v90 = vadd.f32 %v88, %v89
    %s91 = vtos %v90
    %s92 = smul.f32 %s91, %s80
    %v93 = vmul.f32 %v51, %v51
    %v94 = vsel %vm81, %v93, 0.0
    %95 = vadd.xlane.f32.xlu0 %v94
    %v96 = vpop.xlane.xlu0 %95
    %v97 = vrot.slane %v96, 4
    %v98 = vadd.f32 %v96, %v97
    %v99 = vrot.slane %v98, 2
    %v100 = vadd.f32 %v98, %v99
    %v101 = vrot.slane %v100, 1
    %v102 = vadd.f32 %v100, %v101
    %s103 = vtos %v102
    %s104 = smul.f32 %s103, %s80
    %s105 = smul.f32 %s92, %s92
    %s106 = ssub.f32 %s104, %s105
    %s107 = smax.f32 %s106, 1e-05
    %v108 = vstv %s107
    %v109 = vrsqrt.pop %v108
    %v110 = vmul.f32 %v109, %v108
    %v111 = vmul.f32 %v110, %v109
    %v112 = vmul.f32 0.5, %v111
    %v113 = vsub.f32 1.5, %v112
    %v114 = vmul.f32 %v109, %v113
    %vm115 = vweird.f32 %v108
    %vm116 = vweird.f32 %v109
    %vm117 = vmor %vm115, %vm116
    %v118 = vsel %vm117, %v109, %v114
    %s119 = vtos %v118
    %v120 = vstv %s92
    %v121 = vsub.f32 %v51, %v120
    %v122 = vstv %s119
    %v123 = vmul.f32 %v36, %v122
    %125 = vset.pattern.permute.xlu0 0
    %126 = vperm.xlu0 %125, %v123
    %v127 = vpop.permute.xlu0 %126
    %v129 = vmul.f32 %v121, %v127
    %131 = vset.pattern.permute.xlu0 0
    %132 = vperm.xlu0 %131, %v37
    %v133 = vpop.permute.xlu0 %132
    %v135 = vadd.f32 %v129, %v133
    %v137 = vperm.slane %v52, 0
    %v139 = vmul.f32 %v137, %v135
    %v140 = vxor.u32 %v139, 2147483648
    %v141 = vmul.f32 %v140, 1.442695
    %v142 = vpow.pop %v141
    %v143 = vadd.f32 %v142, 1.0
    %v144 = vrcp.pop %v143
    %v145 = vmul.f32 %v143, %v144
    %v146 = vsub.f32 1.0, %v145
    %v147 = vmul.f32 %v144, %v146
    %v148 = vadd.f32 %v144, %v147
    %vm149 = vweird.f32 %v143
    %vm150 = vweird.f32 %v144
    %vm151 = vmor %vm149, %vm150
    %v152 = vsel %vm151, %v144, %v148
    %v153 = vand.u32 2147483647, %v143
    %vm154 = vcmp.eq.f32.partialorder %v153, 8.507059e+37
    %v155 = vand.u32 %v143, 2147483648
    %v156 = vor.u32 1.1754944e-38, %v155
    %v157 = vsel %vm154, %v156, %v152
    %v158 = vmul.f32 1.0, %v157
    %v159 = vmul.f32 %v139, %v158
    %160 = vrot.lane.b32.xlu0 %v159, 1
    %v161 = vpop.permute.xlu0 %160
    %v162 = vsel %vm46, 1, 0
    %vm163 = vcmp.eq.s32.totalorder %v162, 1
    %v164 = vsel %vm163, %v161, 0.0
    %165 = vrot.lane.b32.xlu0 %v159, 127
    %v166 = vpop.permute.xlu0 %165
    %v167 = vsel %vm50, 1, 0
    %vm168 = vcmp.eq.s32.totalorder %v167, 1
    %v169 = vsel %vm168, %v166, 0.0
    %v171 = vrot.slane %v159, 4
    %v173 = vsel %vm81, %v164, %v171
    %v174 = vpack.c.bf16 %v169, %v173
    %vm175 = vcmask 97280
    %v177 = vsel %vm175, %v34, 0
    %vm179 = vcmask 1045504
    %v181 = vsel %vm179, %v174, 0
    %183 = vmatpush.bf16.msra.mxu0 0
    %184 = vmatpush.bf16.msra.mxu0 0
    %185 = vmatpush.bf16.msra.mxu0 0
    %186 = vmatpush.bf16.msra.mxu0 0
    %187 = vmatpush.bf16.msra.mxu0 0
    %188 = vmatpush.bf16.msra.mxu0 0
    %189 = vmatpush.bf16.msra.mxu0 0
    %190 = vmatpush.bf16.msra.mxu0 %v181
    %191 = vmatmul.bf16.gmra.mxu0 %v177
    %v192 = vpop.f32.mrf.mxu0
    %v193 = vadd.f32 0.0, %v192
    %v194 = vpop.f32.mrf.mxu0
    %195 = vdwg.mxu0
    %v196 = vmul.f32 %v137, %v193
    %s197 = smul.f32 %s63, 8.0
    %v198 = vstv %s197
    %v199 = vrcp.pop %v198
    %v200 = vmul.f32 %v198, %v199
    %v201 = vsub.f32 1.0, %v200
    %v202 = vmul.f32 %v199, %v201
    %v203 = vadd.f32 %v199, %v202
    %vm204 = vweird.f32 %v198
    %vm205 = vweird.f32 %v199
    %vm206 = vmor %vm204, %vm205
    %v207 = vsel %vm206, %v199, %v203
    %v208 = vand.u32 2147483647, %v198
    %vm209 = vcmp.eq.f32.partialorder %v208, 8.507059e+37
    %v210 = vand.u32 %v198, 2147483648
    %v211 = vor.u32 1.1754944e-38, %v210
    %v212 = vsel %vm209, %v211, %v207
    %s213 = vtos %v212
    %214 = vadd.xlane.f32.xlu0 %v196
    %v215 = vpop.xlane.xlu0 %214
    %v216 = vrot.slane %v215, 4
    %v217 = vadd.f32 %v215, %v216
    %v218 = vrot.slane %v217, 2
    %v219 = vadd.f32 %v217, %v218
    %v220 = vrot.slane %v219, 1
    %v221 = vadd.f32 %v219, %v220
    %s222 = vtos %v221
    %s223 = smul.f32 %s222, %s213
    %v224 = vmul.f32 %v196, %v196
    %225 = vadd.xlane.f32.xlu0 %v224
    %v226 = vpop.xlane.xlu0 %225
    %v227 = vrot.slane %v226, 4
    %v228 = vadd.f32 %v226, %v227
    %v229 = vrot.slane %v228, 2
    %v230 = vadd.f32 %v228, %v229
    %v231 = vrot.slane %v230, 1
    %v232 = vadd.f32 %v230, %v231
    %s233 = vtos %v232
    %s234 = smul.f32 %s233, %s213
    %s235 = smul.f32 %s223, %s223
    %s236 = ssub.f32 %s234, %s235
    %s237 = smax.f32 %s236, 1e-05
    %v238 = vstv %s237
    %v239 = vrsqrt.pop %v238
    %v240 = vmul.f32 %v239, %v238
    %v241 = vmul.f32 %v240, %v239
    %v242 = vmul.f32 0.5, %v241
    %v243 = vsub.f32 1.5, %v242
    %v244 = vmul.f32 %v239, %v243
    %vm245 = vweird.f32 %v238
    %vm246 = vweird.f32 %v239
    %vm247 = vmor %vm245, %vm246
    %v248 = vsel %vm247, %v239, %v244
    %s249 = vtos %v248
    %v250 = vstv %s223
    %v251 = vsub.f32 %v196, %v250
    %v252 = vstv %s249
    %v253 = vmul.f32 %v38, %v252
    %255 = vset.pattern.permute.xlu0 0
    %256 = vperm.xlu0 %255, %v253
    %v257 = vpop.permute.xlu0 %256
    %v259 = vmul.f32 %v251, %v257
    %261 = vset.pattern.permute.xlu0 0
    %262 = vperm.xlu0 %261, %v39
    %v263 = vpop.permute.xlu0 %262
    %v265 = vadd.f32 %v259, %v263
    %v266 = vmul.f32 %v137, %v265
    %v267 = vxor.u32 %v266, 2147483648
    %v268 = vmul.f32 %v267, 1.442695
    %v269 = vpow.pop %v268
    %v270 = vadd.f32 %v269, 1.0
    %v271 = vrcp.pop %v270
    %v272 = vmul.f32 %v270, %v271
    %v273 = vsub.f32 1.0, %v272
    %v274 = vmul.f32 %v271, %v273
    %v275 = vadd.f32 %v271, %v274
    %vm276 = vweird.f32 %v270
    %vm277 = vweird.f32 %v271
    %vm278 = vmor %vm276, %vm277
    %v279 = vsel %vm278, %v271, %v275
    %v280 = vand.u32 2147483647, %v270
    %vm281 = vcmp.eq.f32.partialorder %v280, 8.507059e+37
    %v282 = vand.u32 %v270, 2147483648
    %v283 = vor.u32 1.1754944e-38, %v282
    %v284 = vsel %vm281, %v283, %v279
    %v285 = vmul.f32 1.0, %v284
    %v286 = vmul.f32 %v266, %v285
    %287 = vrot.lane.b32.xlu0 %v286, 1
    %v288 = vpop.permute.xlu0 %287
    %v289 = vsel %vm163, %v288, 0.0
    %290 = vrot.lane.b32.xlu0 %v286, 127
    %v291 = vpop.permute.xlu0 %290
    %v292 = vsel %vm168, %v291, 0.0
    %v293 = vpack.c.bf16 %v286, %v289
    %v294 = vpack.c.bf16 %v51, %v292
    %296 = vset.pattern.permute.xlu0 0
    %297 = vperm.xlu0 %296, %v40
    %v298 = vpop.permute.xlu0 %297
    %vm300 = vcmask 228352
    %v302 = vsel %vm300, %v35, 0
    %v305 = vsel %vm179, %v294, 0
    %307 = vmatpush.bf16.msra.mxu0 0
    %308 = vmatpush.bf16.msra.mxu0 0
    %309 = vmatpush.bf16.msra.mxu0 0
    %310 = vmatpush.bf16.msra.mxu0 0
    %311 = vmatpush.bf16.msra.mxu0 0
    %312 = vmatpush.bf16.msra.mxu0 0
    %313 = vmatpush.bf16.msra.mxu0 %v305
    %314 = vmatpush.bf16.msra.mxu0 %v293
    %315 = vmatmul.bf16.gmra.mxu0 %v302
    %v316 = vpop.f32.mrf.mxu0
    %v317 = vadd.f32 %v298, %v316
    %v318 = vpop.f32.mrf.mxu0
    %319 = vdwg.mxu0
    %v320 = vmul.f32 %v137, %v317
    %321 = vst [vmem:[#allocation2] sm:$0xff] %v320
    %s322 = scalar_lea.vmem %s0, 4
    %v323 = vld [vmem:[%s322] sm:$0xf]
    %s324 = scalar_lea.vmem %s1, 1
    %v325 = vld [vmem:[%s324] sm:$0x1]
    %v326 = vsel %vm53, %v325, 0.0
    %327 = vadd.xlane.f32.xlu0 %v326
    %v328 = vpop.xlane.xlu0 %327
    %v329 = vrot.slane %v328, 4
    %v330 = vadd.f32 %v328, %v329
    %v331 = vrot.slane %v330, 2
    %v332 = vadd.f32 %v330, %v331
    %v333 = vrot.slane %v332, 1
    %v334 = vadd.f32 %v332, %v333
    %s335 = vtos %v334
    %s336 = smul.f32 %s335, 4.0
    %v337 = vstv %s336
    %v338 = vrcp.pop %v337
    %v339 = vmul.f32 %v337, %v338
    %v340 = vsub.f32 1.0, %v339
    %v341 = vmul.f32 %v338, %v340
    %v342 = vadd.f32 %v338, %v341
    %vm343 = vweird.f32 %v337
    %vm344 = vweird.f32 %v338
    %vm345 = vmor %vm343, %vm344
    %v346 = vsel %vm345, %v338, %v342
    %v347 = vand.u32 2147483647, %v337
    %vm348 = vcmp.eq.f32.partialorder %v347, 8.507059e+37
    %v349 = vand.u32 %v337, 2147483648
    %v350 = vor.u32 1.1754944e-38, %v349
    %v351 = vsel %vm348, %v350, %v346
    %s352 = vtos %v351
    %v353 = vsel %vm81, %v323, 0.0
    %354 = vadd.xlane.f32.xlu0 %v353
    %v355 = vpop.xlane.xlu0 %354
    %v356 = vrot.slane %v355, 4
    %v357 = vadd.f32 %v355, %v356
    %v358 = vrot.slane %v357, 2
    %v359 = vadd.f32 %v357, %v358
    %v360 = vrot.slane %v359, 1
    %v361 = vadd.f32 %v359, %v360
    %s362 = vtos %v361
    %s363 = smul.f32 %s362, %s352
    %v364 = vmul.f32 %v323, %v323
    %v365 = vsel %vm81, %v364, 0.0
    %366 = vadd.xlane.f32.xlu0 %v365
    %v367 = vpop.xlane.xlu0 %366
    %v368 = vrot.slane %v367, 4
    %v369 = vadd.f32 %v367, %v368
    %v370 = vrot.slane %v369, 2
    %v371 = vadd.f32 %v369, %v370
    %v372 = vrot.slane %v371, 1
    %v373 = vadd.f32 %v371, %v372
    %s374 = vtos %v373
    %s375 = smul.f32 %s374, %s352
    %s376 = smul.f32 %s363, %s363
    %s377 = ssub.f32 %s375, %s376
    %s378 = smax.f32 %s377, 1e-05
    %v379 = vstv %s378
    %v380 = vrsqrt.pop %v379
    %v381 = vmul.f32 %v380, %v379
    %v382 = vmul.f32 %v381, %v380
    %v383 = vmul.f32 0.5, %v382
    %v384 = vsub.f32 1.5, %v383
    %v385 = vmul.f32 %v380, %v384
    %vm386 = vweird.f32 %v379
    %vm387 = vweird.f32 %v380
    %vm388 = vmor %vm386, %vm387
    %v389 = vsel %vm388, %v380, %v385
    %s390 = vtos %v389
    %v391 = vstv %s363
    %v392 = vsub.f32 %v323, %v391
    %v393 = vstv %s390
    %v394 = vmul.f32 %v36, %v393
    %396 = vset.pattern.permute.xlu0 0
    %397 = vperm.xlu0 %396, %v394
    %v398 = vpop.permute.xlu0 %397
    %v400 = vmul.f32 %v392, %v398
    %v401 = vadd.f32 %v400, %v133
    %v403 = vperm.slane %v325, 0
    %v405 = vmul.f32 %v403, %v401
    %v406 = vxor.u32 %v405, 2147483648
    %v407 = vmul.f32 %v406, 1.442695
    %v408 = vpow.pop %v407
    %v409 = vadd.f32 %v408, 1.0
    %v410 = vrcp.pop %v409
    %v411 = vmul.f32 %v409, %v410
    %v412 = vsub.f32 1.0, %v411
    %v413 = vmul.f32 %v410, %v412
    %v414 = vadd.f32 %v410, %v413
    %vm415 = vweird.f32 %v409
    %vm416 = vweird.f32 %v410
    %vm417 = vmor %vm415, %vm416
    %v418 = vsel %vm417, %v410, %v414
    %v419 = vand.u32 2147483647, %v409
    %vm420 = vcmp.eq.f32.partialorder %v419, 8.507059e+37
    %v421 = vand.u32 %v409, 2147483648
    %v422 = vor.u32 1.1754944e-38, %v421
    %v423 = vsel %vm420, %v422, %v418
    %v424 = vmul.f32 1.0, %v423
    %v425 = vmul.f32 %v405, %v424
    %426 = vrot.lane.b32.xlu0 %v425, 1
    %v427 = vpop.permute.xlu0 %426
    %v428 = vsel %vm163, %v427, 0.0
    %429 = vrot.lane.b32.xlu0 %v425, 127
    %v430 = vpop.permute.xlu0 %429
    %v431 = vsel %vm168, %v430, 0.0
    %v433 = vrot.slane %v425, 4
    %v435 = vsel %vm81, %v428, %v433
    %v436 = vpack.c.bf16 %v431, %v435
    %v438 = vsel %vm179, %v436, 0
    %440 = vmatpush.bf16.msra.mxu0 0
    %441 = vmatpush.bf16.msra.mxu0 0
    %442 = vmatpush.bf16.msra.mxu0 0
    %443 = vmatpush.bf16.msra.mxu0 0
    %444 = vmatpush.bf16.msra.mxu0 0
    %445 = vmatpush.bf16.msra.mxu0 0
    %446 = vmatpush.bf16.msra.mxu0 0
    %447 = vmatpush.bf16.msra.mxu0 %v438
    %448 = vmatmul.bf16.gmra.mxu0 %v177
    %v449 = vpop.f32.mrf.mxu0
    %v450 = vadd.f32 0.0, %v449
    %v451 = vpop.f32.mrf.mxu0
    %452 = vdwg.mxu0
    %v453 = vmul.f32 %v403, %v450
    %s454 = smul.f32 %s335, 8.0
    %v455 = vstv %s454
    %v456 = vrcp.pop %v455
    %v457 = vmul.f32 %v455, %v456
    %v458 = vsub.f32 1.0, %v457
    %v459 = vmul.f32 %v456, %v458
    %v460 = vadd.f32 %v456, %v459
    %vm461 = vweird.f32 %v455
    %vm462 = vweird.f32 %v456
    %vm463 = vmor %vm461, %vm462
    %v464 = vsel %vm463, %v456, %v460
    %v465 = vand.u32 2147483647, %v455
    %vm466 = vcmp.eq.f32.partialorder %v465, 8.507059e+37
    %v467 = vand.u32 %v455, 2147483648
    %v468 = vor.u32 1.1754944e-38, %v467
    %v469 = vsel %vm466, %v468, %v464
    %s470 = vtos %v469
    %471 = vadd.xlane.f32.xlu0 %v453
    %v472 = vpop.xlane.xlu0 %471
    %v473 = vrot.slane %v472, 4
    %v474 = vadd.f32 %v472, %v473
    %v475 = vrot.slane %v474, 2
    %v476 = vadd.f32 %v474, %v475
    %v477 = vrot.slane %v476, 1
    %v478 = vadd.f32 %v476, %v477
    %s479 = vtos %v478
    %s480 = smul.f32 %s479, %s470
    %v481 = vmul.f32 %v453, %v453
    %482 = vadd.xlane.f32.xlu0 %v481
    %v483 = vpop.xlane.xlu0 %482
    %v484 = vrot.slane %v483, 4
    %v485 = vadd.f32 %v483, %v484
    %v486 = vrot.slane %v485, 2
    %v487 = vadd.f32 %v485, %v486
    %v488 = vrot.slane %v487, 1
    %v489 = vadd.f32 %v487, %v488
    %s490 = vtos %v489
    %s491 = smul.f32 %s490, %s470
    %s492 = smul.f32 %s480, %s480
    %s493 = ssub.f32 %s491, %s492
    %s494 = smax.f32 %s493, 1e-05
    %v495 = vstv %s494
    %v496 = vrsqrt.pop %v495
    %v497 = vmul.f32 %v496, %v495
    %v498 = vmul.f32 %v497, %v496
    %v499 = vmul.f32 0.5, %v498
    %v500 = vsub.f32 1.5, %v499
    %v501 = vmul.f32 %v496, %v500
    %vm502 = vweird.f32 %v495
    %vm503 = vweird.f32 %v496
    %vm504 = vmor %vm502, %vm503
    %v505 = vsel %vm504, %v496, %v501
    %s506 = vtos %v505
    %v507 = vstv %s480
    %v508 = vsub.f32 %v453, %v507
    %v509 = vstv %s506
    %v510 = vmul.f32 %v38, %v509
    %512 = vset.pattern.permute.xlu0 0
    %513 = vperm.xlu0 %512, %v510
    %v514 = vpop.permute.xlu0 %513
    %v516 = vmul.f32 %v508, %v514
    %v517 = vadd.f32 %v516, %v263
    %v518 = vmul.f32 %v403, %v517
    %v519 = vxor.u32 %v518, 2147483648
    %v520 = vmul.f32 %v519, 1.442695
    %v521 = vpow.pop %v520
    %v522 = vadd.f32 %v521, 1.0
    %v523 = vrcp.pop %v522
    %v524 = vmul.f32 %v522, %v523
    %v525 = vsub.f32 1.0, %v524
    %v526 = vmul.f32 %v523, %v525
    %v527 = vadd.f32 %v523, %v526
    %vm528 = vweird.f32 %v522
    %vm529 = vweird.f32 %v523
    %vm530 = vmor %vm528, %vm529
    %v531 = vsel %vm530, %v523, %v527
    %v532 = vand.u32 2147483647, %v522
    %vm533 = vcmp.eq.f32.partialorder %v532, 8.507059e+37
    %v534 = vand.u32 %v522, 2147483648
    %v535 = vor.u32 1.1754944e-38, %v534
    %v536 = vsel %vm533, %v535, %v531
    %v537 = vmul.f32 1.0, %v536
    %v538 = vmul.f32 %v518, %v537
    %539 = vrot.lane.b32.xlu0 %v538, 1
    %v540 = vpop.permute.xlu0 %539
    %v541 = vsel %vm163, %v540, 0.0
    %542 = vrot.lane.b32.xlu0 %v538, 127
    %v543 = vpop.permute.xlu0 %542
    %v544 = vsel %vm168, %v543, 0.0
    %v545 = vpack.c.bf16 %v538, %v541
    %v546 = vpack.c.bf16 %v323, %v544
    %v548 = vsel %vm179, %v546, 0
    %550 = vmatpush.bf16.msra.mxu0 0
    %551 = vmatpush.bf16.msra.mxu0 0
    %552 = vmatpush.bf16.msra.mxu0 0
    %553 = vmatpush.bf16.msra.mxu0 0
    %554 = vmatpush.bf16.msra.mxu0 0
    %555 = vmatpush.bf16.msra.mxu0 0
    %556 = vmatpush.bf16.msra.mxu0 %v548
    %557 = vmatpush.bf16.msra.mxu0 %v545
    %558 = vmatmul.bf16.gmra.mxu0 %v302
    %v559 = vpop.f32.mrf.mxu0
    %v560 = vadd.f32 %v298, %v559
    %v561 = vpop.f32.mrf.mxu0
    %562 = vdwg.mxu0
    %v563 = vmul.f32 %v403, %v560
    %s564 = scalar_lea.vmem [#allocation2], 8
    %565 = vst [vmem:[%s564] sm:$0xff] %v563
    // Predicated region
    $region38: #{mresidual_block.1} parent=1 // pred_check
      _
    $region39: #{mresidual_block.1} parent=1 // pred_check_branch
      %567 = sbr.rel (0) target = $region41
    $region40: #{mresidual_block.1} parent=1 // pred_region
      %569 = vsyncadd [#allocation3], 0
      %s570 = sshll.u32 [#allocation2], 4
      %s571 = int_to_ptr.vmem [resolvable:$true] %s570
      %s572 = sshll.u32 %s9, 4
      %s573 = int_to_ptr.hbm [resolvable:$true] %s572
      %578 = dma.vmem_to_hbm [thread:$0]  %s571, 256, %s573, [#allocation3], 128, 128, 8
    $region41: #{mresidual_block.1} parent=1 // pred_fallthru
      _
    // Predicated region
    $region42: #{mresidual_block.1} parent=1 // pred_check
      _
    $region43: #{mresidual_block.1} parent=1 // pred_check_branch
      %580 = sbr.rel (0) target = $region45
    $region44: #{mresidual_block.1} parent=1 // pred_region
      %582 = dma.done [#allocation3], 256
    $region45: #{mresidual_block.1} parent=1 // pred_fallthru
      _
    %583 = vsyncpa [#allocation3], 1

</llo_original>
